<compile_context>
chip_gen: v6e
topology: v6e:2x2x1
jax: 0.10.0
libtpu: 0.0.40
codegen_flags: <defaults>
</compile_context>

<pallas_src>
import functools

import jax
import jax.numpy as jnp
from jax.experimental import pallas as pl
from jax.experimental.pallas import tpu as pltpu

HIDDEN = 128


def _round_up(x, m):
    return ((x + m - 1) // m) * m


def _mlp_kernel(x_ref, w1_ref, wh_ref, w5_ref, bh_ref, b5_ref, o_ref,
                *, compute_dtype):
    """Fused MLP on one batch tile.

    x_ref:  (tile, input_dim)     activations (f32, cast in-kernel)
    w1_ref: (input_dim, HIDDEN)   layer-1 weight (compute_dtype)
    wh_ref: (3, HIDDEN, HIDDEN)   stacked hidden weights (compute_dtype)
    w5_ref: (HIDDEN, output_dim)  output weight (compute_dtype)
    bh_ref: (4, HIDDEN)           biases of layers 1-4 (f32)
    b5_ref: (1, output_dim)       output bias (f32)
    o_ref:  (tile, output_dim)    result (f32)
    """
    # Layer 1: Linear + ReLU.  x is cast to the MXU operand dtype here (VPU
    # cast, free) instead of in the wrapper (would be an extra HBM pass).
    x = x_ref[...].astype(compute_dtype)
    h = jnp.dot(x, w1_ref[...], preferred_element_type=jnp.float32)
    h = jnp.maximum(h + bh_ref[0:1, :], 0.0)

    # Layers 2-4: Linear + ReLU, weights indexed out of the stacked array.
    for k in range(3):
        h = jnp.dot(h.astype(compute_dtype), wh_ref[k],
                    preferred_element_type=jnp.float32)
        h = jnp.maximum(h + bh_ref[k + 1:k + 2, :], 0.0)

    # Output layer: Linear (no ReLU), narrow (output_dim) lanes, masked store.
    out = jnp.dot(h.astype(compute_dtype), w5_ref[...],
                  preferred_element_type=jnp.float32)
    o_ref[...] = (out + b5_ref[...]).astype(o_ref.dtype)


def pack_params(params, compute_dtype="bfloat16"):
    """One-time parameter packing (hoisted out of the jitted forward).

    params: list of 5 (W, b) pairs with W stored as (in, out).
    compute_dtype: "bfloat16" (default, full-rate MXU on v6e/v7x) or "float32".
    """
    cdt = jnp.bfloat16 if compute_dtype == "bfloat16" else jnp.float32
    (w1, b1), (w2, b2), (w3, b3), (w4, b4), (w5, b5) = params
    return {
        "w1": jnp.asarray(w1, cdt),                                 # (in, H)
        "wh": jnp.stack([w2, w3, w4], axis=0).astype(cdt),          # (3, H, H)
        "w5": jnp.asarray(w5, cdt),                                 # (H, out)
        "bh": jnp.stack([b1, b2, b3, b4], axis=0).astype(jnp.float32),  # (4,H)
        "b5": jnp.asarray(b5, jnp.float32).reshape(1, -1),          # (1, out)
    }


@functools.partial(jax.jit, static_argnames=("batch_tile",))
def mlp_forward(x, packed, *, batch_tile=1024):
    """x: (B, input_dim) float32. packed: output of pack_params()."""
    B, input_dim = x.shape
    output_dim = packed["w5"].shape[1]
    cdt = packed["w1"].dtype

    # Batch tiling:
    #  * tiny batches -> one grid step (no pipeline overhead),
    #  * large batches -> tiles of up to batch_tile rows, but always >= 2 grid
    #    steps so the "parallel" axis can shard across v7x's two TensorCores.
    if B <= 256:
        tile = B
    else:
        tile = min(batch_tile, _round_up(pl.cdiv(B, 2), 8))
    n_tiles = pl.cdiv(B, tile)  # ragged last tile handled by Pallas masking

    def replicated(arr):
        nd = arr.ndim
        return pl.BlockSpec(arr.shape, lambda i, _nd=nd: (0,) * _nd)

    in_specs = [
        pl.BlockSpec((tile, input_dim), lambda i: (i, 0)),  # x, tiled over batch
        replicated(packed["w1"]),
        replicated(packed["wh"]),
        replicated(packed["w5"]),
        replicated(packed["bh"]),
        replicated(packed["b5"]),
    ]
    out_spec = pl.BlockSpec((tile, output_dim), lambda i: (i, 0))

    return pl.pallas_call(
        functools.partial(_mlp_kernel, compute_dtype=cdt),
        out_shape=jax.ShapeDtypeStruct((B, output_dim), jnp.float32),
        grid_spec=pltpu.PrefetchScalarGridSpec(
            num_scalar_prefetch=0,
            grid=(n_tiles,),
            in_specs=in_specs,
            out_specs=out_spec,
        ),
        compiler_params=pltpu.CompilerParams(
            dimension_semantics=("parallel",)),
    )(x, packed["w1"], packed["wh"], packed["w5"], packed["bh"], packed["b5"])


def init_mlp_params(key, input_dim, output_dim):
    """Deterministic init mirroring the nn.Linear shapes of the module."""
    dims = [(input_dim, HIDDEN), (HIDDEN, HIDDEN), (HIDDEN, HIDDEN),
            (HIDDEN, HIDDEN), (HIDDEN, output_dim)]
    params = []
    for (fan_in, fan_out) in dims:
        key, kw, kb = jax.random.split(key, 3)
        bound = 1.0 / jnp.sqrt(fan_in)
        # PyTorch stores weight as (out, in); we store transposed (in, out).
        w = jax.random.uniform(kw, (fan_in, fan_out), jnp.float32, -bound, bound)
        b = jax.random.uniform(kb, (fan_out,), jnp.float32, -bound, bound)
        params.append((w, b))
    return params


def mlp_reference(x, params):
    h = x
    for i, (w, b) in enumerate(params):
        h = h @ w + b
        if i < len(params) - 1:
            h = jnp.maximum(h, 0.0)
    return h


if __name__ == "__main__":
    key = jax.random.PRNGKey(0)
    batch, input_dim, output_dim = 16, 32, 8

    kx, kp = jax.random.split(key)
    x = jax.random.normal(kx, (batch, input_dim), jnp.float32)
    params = init_mlp_params(kp, input_dim, output_dim)
    ref = mlp_reference(x, params)

    packed_f32 = pack_params(params, compute_dtype="float32")
    packed_bf16 = pack_params(params)  # default: bf16 MXU operands

    # Tiny batch -> single grid step; f32 path, tight tolerance.
    out = jax.block_until_ready(mlp_forward(x, packed_f32))
    assert out.shape == (batch, output_dim)
    assert jnp.allclose(out, ref, atol=1e-4, rtol=1e-4), "f32 mismatch (small)"

    # bf16 MXU-operand path (f32 accumulation), looser tolerance.
    out_bf = jax.block_until_ready(mlp_forward(x, packed_bf16))
    assert jnp.allclose(out_bf, ref, atol=5e-2, rtol=5e-2), "bf16 mismatch (small)"

    # Larger, ragged batch: 2 grid steps + partial last block masking.
    xb = jax.random.normal(kx, (600, input_dim), jnp.float32)
    refb = mlp_reference(xb, params)
    outb = jax.block_until_ready(mlp_forward(xb, packed_f32))
    assert outb.shape == (600, output_dim)
    assert jnp.allclose(outb, refb, atol=1e-4, rtol=1e-4), "f32 mismatch (tiled)"

    outb_bf = jax.block_until_ready(mlp_forward(xb, packed_bf16))
    assert jnp.allclose(outb_bf, refb, atol=5e-2, rtol=5e-2), "bf16 mismatch (tiled)"

    print("KERNEL_OK")
</pallas_src>

<mosaic_0001>
module attributes {stable_mosaic.version = 11 : i64} {
  func.func @_mlp_kernel(%arg0: i32, %arg1: memref<16x32xf32, #tpu.memory_space<vmem>>, %arg2: memref<32x128xf32, #tpu.memory_space<vmem>>, %arg3: memref<3x128x128xf32, #tpu.memory_space<vmem>>, %arg4: memref<128x8xf32, #tpu.memory_space<vmem>>, %arg5: memref<4x128xf32, #tpu.memory_space<vmem>>, %arg6: memref<1x8xf32, #tpu.memory_space<vmem>>, %arg7: memref<16x8xf32, #tpu.memory_space<vmem>>) attributes {dimension_semantics = [#tpu.dimension_semantics<parallel>], iteration_bounds = array<i64: 1>, scalar_prefetch = 0 : i64, scratch_operands = 0 : i64, tpu.core_type = #tpu.core_type<tc>, window_params = [{transform_indices = @transform_0, window_bounds = array<i64: 16, 32>}, {pipeline_mode = #tpu.pipeline_mode<synchronous>, transform_indices = @transform_1, window_bounds = array<i64: 32, 128>}, {pipeline_mode = #tpu.pipeline_mode<synchronous>, transform_indices = @transform_2, window_bounds = array<i64: 3, 128, 128>}, {pipeline_mode = #tpu.pipeline_mode<synchronous>, transform_indices = @transform_3, window_bounds = array<i64: 128, 8>}, {pipeline_mode = #tpu.pipeline_mode<synchronous>, transform_indices = @transform_4, window_bounds = array<i64: 4, 128>}, {pipeline_mode = #tpu.pipeline_mode<synchronous>, transform_indices = @transform_5, window_bounds = array<i64: 1, 8>}, {transform_indices = @transform_6, window_bounds = array<i64: 16, 8>}]} {
    %c0 = arith.constant 0 : index
    %c0_0 = arith.constant 0 : index
    %0 = vector.load %arg1[%c0, %c0_0] : memref<16x32xf32, #tpu.memory_space<vmem>>, vector<16x32xf32>
    %c0_1 = arith.constant 0 : index
    %c0_2 = arith.constant 0 : index
    %1 = vector.load %arg2[%c0_1, %c0_2] : memref<32x128xf32, #tpu.memory_space<vmem>>, vector<32x128xf32>
    %cst = arith.constant dense<0.000000e+00> : vector<16x128xf32>
    %2 = tpu.matmul %0, %1, %cst {dimension_numbers = #tpu.dot_dimension_numbers<[1], [0], [0], [1], [0, 0, 1, 1], [], []>} : vector<16x32xf32>, vector<32x128xf32>, vector<16x128xf32> -> vector<16x128xf32>
    %c0_3 = arith.constant 0 : index
    %c0_4 = arith.constant 0 : index
    %3 = vector.load %arg5[%c0_3, %c0_4] : memref<4x128xf32, #tpu.memory_space<vmem>>, vector<1x128xf32>
    %4 = vector.broadcast %3 : vector<1x128xf32> to vector<16x128xf32>
    %5 = arith.addf %2, %4 : vector<16x128xf32>
    %cst_5 = arith.constant 0.000000e+00 : f32
    %6 = vector.broadcast %cst_5 : f32 to vector<16x128xf32>
    %7 = arith.maximumf %5, %6 : vector<16x128xf32>
    %c0_6 = arith.constant 0 : index
    %c0_7 = arith.constant 0 : index
    %c0_8 = arith.constant 0 : index
    %8 = vector.load %arg3[%c0_6, %c0_7, %c0_8] : memref<3x128x128xf32, #tpu.memory_space<vmem>>, vector<1x128x128xf32>
    %9 = vector.shape_cast %8 : vector<1x128x128xf32> to vector<128x128xf32>
    %cst_9 = arith.constant dense<0.000000e+00> : vector<16x128xf32>
    %10 = tpu.matmul %7, %9, %cst_9 {dimension_numbers = #tpu.dot_dimension_numbers<[1], [0], [0], [1], [0, 0, 1, 1], [], []>} : vector<16x128xf32>, vector<128x128xf32>, vector<16x128xf32> -> vector<16x128xf32>
    %c1 = arith.constant 1 : index
    %c0_10 = arith.constant 0 : index
    %11 = vector.load %arg5[%c1, %c0_10] : memref<4x128xf32, #tpu.memory_space<vmem>>, vector<1x128xf32>
    %12 = vector.broadcast %11 : vector<1x128xf32> to vector<16x128xf32>
    %13 = arith.addf %10, %12 : vector<16x128xf32>
    %cst_11 = arith.constant 0.000000e+00 : f32
    %14 = vector.broadcast %cst_11 : f32 to vector<16x128xf32>
    %15 = arith.maximumf %13, %14 : vector<16x128xf32>
    %c1_12 = arith.constant 1 : index
    %c0_13 = arith.constant 0 : index
    %c0_14 = arith.constant 0 : index
    %16 = vector.load %arg3[%c1_12, %c0_13, %c0_14] : memref<3x128x128xf32, #tpu.memory_space<vmem>>, vector<1x128x128xf32>
    %17 = vector.shape_cast %16 : vector<1x128x128xf32> to vector<128x128xf32>
    %cst_15 = arith.constant dense<0.000000e+00> : vector<16x128xf32>
    %18 = tpu.matmul %15, %17, %cst_15 {dimension_numbers = #tpu.dot_dimension_numbers<[1], [0], [0], [1], [0, 0, 1, 1], [], []>} : vector<16x128xf32>, vector<128x128xf32>, vector<16x128xf32> -> vector<16x128xf32>
    %c2 = arith.constant 2 : index
    %c0_16 = arith.constant 0 : index
    %19 = vector.load %arg5[%c2, %c0_16] : memref<4x128xf32, #tpu.memory_space<vmem>>, vector<1x128xf32>
    %20 = vector.broadcast %19 : vector<1x128xf32> to vector<16x128xf32>
    %21 = arith.addf %18, %20 : vector<16x128xf32>
    %cst_17 = arith.constant 0.000000e+00 : f32
    %22 = vector.broadcast %cst_17 : f32 to vector<16x128xf32>
    %23 = arith.maximumf %21, %22 : vector<16x128xf32>
    %c2_18 = arith.constant 2 : index
    %c0_19 = arith.constant 0 : index
    %c0_20 = arith.constant 0 : index
    %24 = vector.load %arg3[%c2_18, %c0_19, %c0_20] : memref<3x128x128xf32, #tpu.memory_space<vmem>>, vector<1x128x128xf32>
    %25 = vector.shape_cast %24 : vector<1x128x128xf32> to vector<128x128xf32>
    %cst_21 = arith.constant dense<0.000000e+00> : vector<16x128xf32>
    %26 = tpu.matmul %23, %25, %cst_21 {dimension_numbers = #tpu.dot_dimension_numbers<[1], [0], [0], [1], [0, 0, 1, 1], [], []>} : vector<16x128xf32>, vector<128x128xf32>, vector<16x128xf32> -> vector<16x128xf32>
    %c3 = arith.constant 3 : index
    %c0_22 = arith.constant 0 : index
    %27 = vector.load %arg5[%c3, %c0_22] : memref<4x128xf32, #tpu.memory_space<vmem>>, vector<1x128xf32>
    %28 = vector.broadcast %27 : vector<1x128xf32> to vector<16x128xf32>
    %29 = arith.addf %26, %28 : vector<16x128xf32>
    %cst_23 = arith.constant 0.000000e+00 : f32
    %30 = vector.broadcast %cst_23 : f32 to vector<16x128xf32>
    %31 = arith.maximumf %29, %30 : vector<16x128xf32>
    %c0_24 = arith.constant 0 : index
    %c0_25 = arith.constant 0 : index
    %32 = vector.load %arg4[%c0_24, %c0_25] : memref<128x8xf32, #tpu.memory_space<vmem>>, vector<128x8xf32>
    %cst_26 = arith.constant dense<0.000000e+00> : vector<16x8xf32>
    %33 = tpu.matmul %31, %32, %cst_26 {dimension_numbers = #tpu.dot_dimension_numbers<[1], [0], [0], [1], [0, 0, 1, 1], [], []>} : vector<16x128xf32>, vector<128x8xf32>, vector<16x8xf32> -> vector<16x8xf32>
    %c0_27 = arith.constant 0 : index
    %c0_28 = arith.constant 0 : index
    %34 = vector.load %arg6[%c0_27, %c0_28] : memref<1x8xf32, #tpu.memory_space<vmem>>, vector<1x8xf32>
    %35 = vector.broadcast %34 : vector<1x8xf32> to vector<16x8xf32>
    %36 = arith.addf %33, %35 : vector<16x8xf32>
    %c0_29 = arith.constant 0 : index
    %c0_30 = arith.constant 0 : index
    %37 = vector.load %arg7[%c0_29, %c0_30] : memref<16x8xf32, #tpu.memory_space<vmem>>, vector<16x8xf32>
    tpu.vector_store %arg7[%c0_29, %c0_30], %36 {strides = array<i32>} : memref<16x8xf32, #tpu.memory_space<vmem>>, vector<16x8xf32>,
    return
  }
  func.func @transform_0(%arg0: i32) -> (i32, i32) {
    %c0_i32 = arith.constant 0 : i32
    %c0_i32_0 = arith.constant 0 : i32
    return %arg0, %c0_i32 : i32, i32
  }
  func.func @transform_1(%arg0: i32) -> (i32, i32) {
    %c0_i32 = arith.constant 0 : i32
    %c0_i32_0 = arith.constant 0 : i32
    %c0_i32_1 = arith.constant 0 : i32
    return %c0_i32, %c0_i32_0 : i32, i32
  }
  func.func @transform_2(%arg0: i32) -> (i32, i32, i32) {
    %c0_i32 = arith.constant 0 : i32
    %c0_i32_0 = arith.constant 0 : i32
    %c0_i32_1 = arith.constant 0 : i32
    %c0_i32_2 = arith.constant 0 : i32
    return %c0_i32, %c0_i32_0, %c0_i32_1 : i32, i32, i32
  }
  func.func @transform_3(%arg0: i32) -> (i32, i32) {
    %c0_i32 = arith.constant 0 : i32
    %c0_i32_0 = arith.constant 0 : i32
    %c0_i32_1 = arith.constant 0 : i32
    return %c0_i32, %c0_i32_0 : i32, i32
  }
  func.func @transform_4(%arg0: i32) -> (i32, i32) {
    %c0_i32 = arith.constant 0 : i32
    %c0_i32_0 = arith.constant 0 : i32
    %c0_i32_1 = arith.constant 0 : i32
    return %c0_i32, %c0_i32_0 : i32, i32
  }
  func.func @transform_5(%arg0: i32) -> (i32, i32) {
    %c0_i32 = arith.constant 0 : i32
    %c0_i32_0 = arith.constant 0 : i32
    %c0_i32_1 = arith.constant 0 : i32
    return %c0_i32, %c0_i32_0 : i32, i32
  }
  func.func @transform_6(%arg0: i32) -> (i32, i32) {
    %c0_i32 = arith.constant 0 : i32
    %c0_i32_0 = arith.constant 0 : i32
    return %arg0, %c0_i32 : i32, i32
  }
}

</mosaic_0001>

<llo_original>
// kernel: mlp_forward.1
$region0: #{mlp_forward.1}
  #allocation0 [shape = 'u32[]', space=smem, size = 0x4, offset = 0x4, fixed_abs, tag = 'smem constant byte address 0x4 - core index']
  #allocation1 [shape = 'u32[144,128]{1,0:T(1,128)}', space=vmem, size = 0x12000, scoped, tag = 'internal scratch']
  %s0 = inlined_call_operand.vmem [shape: f32[16,32], index: 0, kind: input, shape index: {}]
  %s1 = inlined_call_operand.vmem [shape: f32[32,128], index: 1, kind: input, shape index: {}]
  %s2 = inlined_call_operand.hbm [shape: f32[3,128,128], index: 2, kind: input, shape index: {}]
  %s3 = inlined_call_operand.vmem [shape: f32[128,8], index: 3, kind: input, shape index: {}]
  %s4 = inlined_call_operand.vmem [shape: f32[4,128], index: 4, kind: input, shape index: {}]
  %s5 = inlined_call_operand.vmem [shape: f32[1,8], index: 5, kind: input, shape index: {}]
  %s6 = inlined_call_operand.vmem [shape: f32[16,8], index: 6, kind: output, shape index: {}]
  %s7 = sld [smem:[#allocation0]]
  $region38: #{mlp_forward.1} parent=0
    _
  %s9 = ssub.s32 1, %s7
  %s10 = scalar_select 0, %s9, %s7
  $region1: #{mlp_forward.1} parent=0
    #allocation2 [shape = 'u8[196608]{0}', space=vmem, size = 0x30000, scoped, tag = 'input window, operand 2, single buffered']
    #allocation3 [shape = 's32[1]{0}', space=sflag, size = 0x4, scoped, tag = 'scoped memory for mlp_forward.1']
    %11 = vsyncpa [#allocation3], 0
    // Predicated region
    $region2: #{mlp_forward.1} parent=1 // pred_check
      _
    $region3: #{mlp_forward.1} parent=1 // pred_check_branch
      %13 = sbr.rel (0) target = $region5
    $region4: #{mlp_forward.1} parent=1 // pred_region
      _
    $region5: #{mlp_forward.1} parent=1 // pred_fallthru
      _
    // Predicated region
    $region6: #{mlp_forward.1} parent=1 // pred_check
      _
    $region7: #{mlp_forward.1} parent=1 // pred_check_branch
      %15 = sbr.rel (0) target = $region9
    $region8: #{mlp_forward.1} parent=1 // pred_region
      _
    $region9: #{mlp_forward.1} parent=1 // pred_fallthru
      _
    // Predicated region
    $region10: #{mlp_forward.1} parent=1 // pred_check
      _
    $region11: #{mlp_forward.1} parent=1 // pred_check_branch
      %17 = sbr.rel (0) target = $region13
    $region12: #{mlp_forward.1} parent=1 // pred_region
      %s19 = ssub.s32 6144, 6144
      %20 = vsyncadd [#allocation3], %s19
      %s21 = sshll.u32 [#allocation2], 4
      %s22 = int_to_ptr.vmem [resolvable:$true] %s21
      %27 = dma.hbm_to_vmem [thread:$0]  %s2, 6144, %s22, [#allocation3], 128, 128, 8
    $region13: #{mlp_forward.1} parent=1 // pred_fallthru
      _
    // Predicated region
    $region14: #{mlp_forward.1} parent=1 // pred_check
      _
    $region15: #{mlp_forward.1} parent=1 // pred_check_branch
      %29 = sbr.rel (0) target = $region17
    $region16: #{mlp_forward.1} parent=1 // pred_region
      _
    $region17: #{mlp_forward.1} parent=1 // pred_fallthru
      _
    // Predicated region
    $region18: #{mlp_forward.1} parent=1 // pred_check
      _
    $region19: #{mlp_forward.1} parent=1 // pred_check_branch
      %31 = sbr.rel (0) target = $region21
    $region20: #{mlp_forward.1} parent=1 // pred_region
      _
    $region21: #{mlp_forward.1} parent=1 // pred_fallthru
      _
    // Predicated region
    $region22: #{mlp_forward.1} parent=1 // pred_check
      _
    $region23: #{mlp_forward.1} parent=1 // pred_check_branch
      %33 = sbr.rel (0) target = $region25
    $region24: #{mlp_forward.1} parent=1 // pred_region
      _
    $region25: #{mlp_forward.1} parent=1 // pred_fallthru
      _
    // Predicated region
    $region26: #{mlp_forward.1} parent=1 // pred_check
      _
    $region27: #{mlp_forward.1} parent=1 // pred_check_branch
      %35 = sbr.rel (0) target = $region29
    $region28: #{mlp_forward.1} parent=1 // pred_region
      %36 = dma.done [#allocation3], 6144
    $region29: #{mlp_forward.1} parent=1 // pred_fallthru
      _
    %v37 = vld [vmem:[%s0] sm:$0xff]
    %v38 = vld [vmem:[%s0 + $0x8] sm:$0xff]
    %v39 = vld [vmem:[%s1] sm:$0xff]
    %v40 = vld [vmem:[%s1 + $0x8] sm:$0xff]
    %v41 = vld [vmem:[%s1 + $0x10] sm:$0xff]
    %v42 = vld [vmem:[%s1 + $0x18] sm:$0xff]
    %v43 = vld [vmem:[%s4] sm:$0x1]
    %v44 = vlaneseq
    %v45 = vshrl.u32 %v44, 7
    %v46 = vsub.s32 0, %v45
    %v47 = vrot.slane %v43, %v46
    %vm48 = vcmask 261120
    %v50 = vsel %vm48, %v37, 0
    %v53 = vsel %vm48, %v38, 0
    %55 = vmatprep.subr.mxu0 0.0
    %56 = vmatpush1.msra.mxu0 0.0
    %57 = vmatprep.subr.mxu0 0.0
    %58 = vmatpush1.msra.mxu0 0.0
    %59 = vmatprep.subr.mxu0 0.0
    %60 = vmatpush1.msra.mxu0 0.0
    %61 = vmatprep.subr.mxu0 0.0
    %62 = vmatpush1.msra.mxu0 0.0
    %63 = vmatprep.subr.mxu0 0.0
    %64 = vmatpush1.msra.mxu0 0.0
    %65 = vmatprep.subr.mxu0 0.0
    %66 = vmatpush1.msra.mxu0 0.0
    %67 = vmatprep.subr.mxu0 0.0
    %68 = vmatpush1.msra.mxu0 0.0
    %69 = vmatprep.subr.mxu0 0.0
    %70 = vmatpush1.msra.mxu0 0.0
    %71 = vmatprep.subr.mxu0 0.0
    %72 = vmatpush1.msra.mxu0 0.0
    %73 = vmatprep.subr.mxu0 0.0
    %74 = vmatpush1.msra.mxu0 0.0
    %75 = vmatprep.subr.mxu0 0.0
    %76 = vmatpush1.msra.mxu0 0.0
    %77 = vmatprep.subr.mxu0 0.0
    %78 = vmatpush1.msra.mxu0 0.0
    %79 = vmatprep.subr.mxu0 0.0
    %80 = vmatpush1.msra.mxu0 %v42
    %81 = vmatprep.subr.mxu0 0.0
    %82 = vmatpush1.msra.mxu0 %v41
    %83 = vmatprep.subr.mxu0 0.0
    %84 = vmatpush1.msra.mxu0 %v40
    %85 = vmatprep.subr.mxu0 0.0
    %86 = vmatpush1.msra.mxu0 %v39
    %87 = vmatprep.subr.mxu0 0.0
    %88 = vmatpush2.msra.mxu0 0.0
    %89 = vmatprep.subr.mxu0 0.0
    %90 = vmatpush2.msra.mxu0 0.0
    %91 = vmatprep.subr.mxu0 0.0
    %92 = vmatpush2.msra.mxu0 0.0
    %93 = vmatprep.subr.mxu0 0.0
    %94 = vmatpush2.msra.mxu0 0.0
    %95 = vmatprep.subr.mxu0 0.0
    %96 = vmatpush2.msra.mxu0 0.0
    %97 = vmatprep.subr.mxu0 0.0
    %98 = vmatpush2.msra.mxu0 0.0
    %99 = vmatprep.subr.mxu0 0.0
    %100 = vmatpush2.msra.mxu0 0.0
    %101 = vmatprep.subr.mxu0 0.0
    %102 = vmatpush2.msra.mxu0 0.0
    %103 = vmatprep.subr.mxu0 0.0
    %104 = vmatpush2.msra.mxu0 0.0
    %105 = vmatprep.subr.mxu0 0.0
    %106 = vmatpush2.msra.mxu0 0.0
    %107 = vmatprep.subr.mxu0 0.0
    %108 = vmatpush2.msra.mxu0 0.0
    %109 = vmatprep.subr.mxu0 0.0
    %110 = vmatpush2.msra.mxu0 0.0
    %111 = vmatprep.subr.mxu0 0.0
    %112 = vmatpush2.msra.mxu0 0.0
    %113 = vmatprep.subr.mxu0 0.0
    %114 = vmatpush2.msra.mxu0 0.0
    %115 = vmatprep.subr.mxu0 0.0
    %116 = vmatpush2.msra.mxu0 0.0
    %117 = vmatprep.subr.mxu0 0.0
    %118 = vmatpush2.msra.mxu0 0.0
    %119 = vmatprep.mubr.f32.mxu0 0.0
    %120 = vmatmul.mubr.f32.gmra.mxu0 %v50
    %v121 = vpop.f32.mrf.mxu0
    %v122 = vadd.f32 %v47, %v121
    %v123 = vpop.f32.mrf.mxu0
    %124 = vmatprep.mubr.f32.mxu0 0.0
    %125 = vmatmul.mubr.f32.gmra.mxu0 %v53
    %v126 = vpop.f32.mrf.mxu0
    %v127 = vadd.f32 %v47, %v126
    %v128 = vpop.f32.mrf.mxu0
    %129 = vdwg.mxu0
    %v130 = vmax.f32 %v122, 0.0
    %v131 = vmax.f32 %v127, 0.0
    %v132 = vld [vmem:[#allocation2] sm:$0xff]
    %v133 = vld [vmem:[#allocation2 + $0x8] sm:$0xff]
    %v134 = vld [vmem:[#allocation2 + $0x10] sm:$0xff]
    %v135 = vld [vmem:[#allocation2 + $0x18] sm:$0xff]
    %v136 = vld [vmem:[#allocation2 + $0x20] sm:$0xff]
    %v137 = vld [vmem:[#allocation2 + $0x28] sm:$0xff]
    %v138 = vld [vmem:[#allocation2 + $0x30] sm:$0xff]
    %v139 = vld [vmem:[#allocation2 + $0x38] sm:$0xff]
    %v140 = vld [vmem:[#allocation2 + $0x40] sm:$0xff]
    %v141 = vld [vmem:[#allocation2 + $0x48] sm:$0xff]
    %v142 = vld [vmem:[#allocation2 + $0x50] sm:$0xff]
    %v143 = vld [vmem:[#allocation2 + $0x58] sm:$0xff]
    %v144 = vld [vmem:[#allocation2 + $0x60] sm:$0xff]
    %v145 = vld [vmem:[#allocation2 + $0x68] sm:$0xff]
    %v146 = vld [vmem:[#allocation2 + $0x70] sm:$0xff]
    %v147 = vld [vmem:[#allocation2 + $0x78] sm:$0xff]
    %v148 = vld [vmem:[%s4 + $0x1] sm:$0x1]
    %v149 = vlaneseq
    %v150 = vshrl.u32 %v149, 7
    %v151 = vsub.s32 0, %v150
    %v152 = vrot.slane %v148, %v151
    %153 = vmatprep.subr.mxu0 0.0
    %154 = vmatpush1.msra.mxu0 %v147
    %155 = vmatprep.subr.mxu0 0.0
    %156 = vmatpush1.msra.mxu0 %v146
    %157 = vmatprep.subr.mxu0 0.0
    %158 = vmatpush1.msra.mxu0 %v145
    %159 = vmatprep.subr.mxu0 0.0
    %160 = vmatpush1.msra.mxu0 %v144
    %161 = vmatprep.subr.mxu0 0.0
    %162 = vmatpush1.msra.mxu0 %v143
    %163 = vmatprep.subr.mxu0 0.0
    %164 = vmatpush1.msra.mxu0 %v142
    %165 = vmatprep.subr.mxu0 0.0
    %166 = vmatpush1.msra.mxu0 %v141
    %167 = vmatprep.subr.mxu0 0.0
    %168 = vmatpush1.msra.mxu0 %v140
    %169 = vmatprep.subr.mxu0 0.0
    %170 = vmatpush1.msra.mxu0 %v139
    %171 = vmatprep.subr.mxu0 0.0
    %172 = vmatpush1.msra.mxu0 %v138
    %173 = vmatprep.subr.mxu0 0.0
    %174 = vmatpush1.msra.mxu0 %v137
    %175 = vmatprep.subr.mxu0 0.0
    %176 = vmatpush1.msra.mxu0 %v136
    %177 = vmatprep.subr.mxu0 0.0
    %178 = vmatpush1.msra.mxu0 %v135
    %179 = vmatprep.subr.mxu0 0.0
    %180 = vmatpush1.msra.mxu0 %v134
    %181 = vmatprep.subr.mxu0 0.0
    %182 = vmatpush1.msra.mxu0 %v133
    %183 = vmatprep.subr.mxu0 0.0
    %184 = vmatpush1.msra.mxu0 %v132
    %185 = vmatprep.subr.mxu0 0.0
    %186 = vmatpush2.msra.mxu0 0.0
    %187 = vmatprep.subr.mxu0 0.0
    %188 = vmatpush2.msra.mxu0 0.0
    %189 = vmatprep.subr.mxu0 0.0
    %190 = vmatpush2.msra.mxu0 0.0
    %191 = vmatprep.subr.mxu0 0.0
    %192 = vmatpush2.msra.mxu0 0.0
    %193 = vmatprep.subr.mxu0 0.0
    %194 = vmatpush2.msra.mxu0 0.0
    %195 = vmatprep.subr.mxu0 0.0
    %196 = vmatpush2.msra.mxu0 0.0
    %197 = vmatprep.subr.mxu0 0.0
    %198 = vmatpush2.msra.mxu0 0.0
    %199 = vmatprep.subr.mxu0 0.0
    %200 = vmatpush2.msra.mxu0 0.0
    %201 = vmatprep.subr.mxu0 0.0
    %202 = vmatpush2.msra.mxu0 0.0
    %203 = vmatprep.subr.mxu0 0.0
    %204 = vmatpush2.msra.mxu0 0.0
    %205 = vmatprep.subr.mxu0 0.0
    %206 = vmatpush2.msra.mxu0 0.0
    %207 = vmatprep.subr.mxu0 0.0
    %208 = vmatpush2.msra.mxu0 0.0
    %209 = vmatprep.subr.mxu0 0.0
    %210 = vmatpush2.msra.mxu0 0.0
    %211 = vmatprep.subr.mxu0 0.0
    %212 = vmatpush2.msra.mxu0 0.0
    %213 = vmatprep.subr.mxu0 0.0
    %214 = vmatpush2.msra.mxu0 0.0
    %215 = vmatprep.subr.mxu0 0.0
    %216 = vmatpush2.msra.mxu0 0.0
    %217 = vmatprep.mubr.f32.mxu0 0.0
    %218 = vmatmul.mubr.f32.gmra.mxu0 %v130
    %v219 = vpop.f32.mrf.mxu0
    %v220 = vadd.f32 %v152, %v219
    %v221 = vpop.f32.mrf.mxu0
    %222 = vmatprep.mubr.f32.mxu0 0.0
    %223 = vmatmul.mubr.f32.gmra.mxu0 %v131
    %v224 = vpop.f32.mrf.mxu0
    %v225 = vadd.f32 %v152, %v224
    %v226 = vpop.f32.mrf.mxu0
    %227 = vdwg.mxu0
    %v228 = vmax.f32 %v220, 0.0
    %v229 = vmax.f32 %v225, 0.0
    %s230 = scalar_lea.vmem [#allocation2], 128
    %v231 = vld [vmem:[%s230] sm:$0xff]
    %v232 = vld [vmem:[%s230 + $0x8] sm:$0xff]
    %v233 = vld [vmem:[%s230 + $0x10] sm:$0xff]
    %v234 = vld [vmem:[%s230 + $0x18] sm:$0xff]
    %v235 = vld [vmem:[%s230 + $0x20] sm:$0xff]
    %v236 = vld [vmem:[%s230 + $0x28] sm:$0xff]
    %v237 = vld [vmem:[%s230 + $0x30] sm:$0xff]
    %v238 = vld [vmem:[%s230 + $0x38] sm:$0xff]
    %v239 = vld [vmem:[%s230 + $0x40] sm:$0xff]
    %v240 = vld [vmem:[%s230 + $0x48] sm:$0xff]
    %v241 = vld [vmem:[%s230 + $0x50] sm:$0xff]
    %v242 = vld [vmem:[%s230 + $0x58] sm:$0xff]
    %v243 = vld [vmem:[%s230 + $0x60] sm:$0xff]
    %v244 = vld [vmem:[%s230 + $0x68] sm:$0xff]
    %v245 = vld [vmem:[%s230 + $0x70] sm:$0xff]
    %v246 = vld [vmem:[%s230 + $0x78] sm:$0xff]
    %v247 = vld [vmem:[%s4 + $0x2] sm:$0x1]
    %v248 = vlaneseq
    %v249 = vshrl.u32 %v248, 7
    %v250 = vsub.s32 0, %v249
    %v251 = vrot.slane %v247, %v250
    %252 = vmatprep.subr.mxu0 0.0
    %253 = vmatpush1.msra.mxu0 %v246
    %254 = vmatprep.subr.mxu0 0.0
    %255 = vmatpush1.msra.mxu0 %v245
    %256 = vmatprep.subr.mxu0 0.0
    %257 = vmatpush1.msra.mxu0 %v244
    %258 = vmatprep.subr.mxu0 0.0
    %259 = vmatpush1.msra.mxu0 %v243
    %260 = vmatprep.subr.mxu0 0.0
    %261 = vmatpush1.msra.mxu0 %v242
    %262 = vmatprep.subr.mxu0 0.0
    %263 = vmatpush1.msra.mxu0 %v241
    %264 = vmatprep.subr.mxu0 0.0
    %265 = vmatpush1.msra.mxu0 %v240
    %266 = vmatprep.subr.mxu0 0.0
    %267 = vmatpush1.msra.mxu0 %v239
    %268 = vmatprep.subr.mxu0 0.0
    %269 = vmatpush1.msra.mxu0 %v238
    %270 = vmatprep.subr.mxu0 0.0
    %271 = vmatpush1.msra.mxu0 %v237
    %272 = vmatprep.subr.mxu0 0.0
    %273 = vmatpush1.msra.mxu0 %v236
    %274 = vmatprep.subr.mxu0 0.0
    %275 = vmatpush1.msra.mxu0 %v235
    %276 = vmatprep.subr.mxu0 0.0
    %277 = vmatpush1.msra.mxu0 %v234
    %278 = vmatprep.subr.mxu0 0.0
    %279 = vmatpush1.msra.mxu0 %v233
    %280 = vmatprep.subr.mxu0 0.0
    %281 = vmatpush1.msra.mxu0 %v232
    %282 = vmatprep.subr.mxu0 0.0
    %283 = vmatpush1.msra.mxu0 %v231
    %284 = vmatprep.subr.mxu0 0.0
    %285 = vmatpush2.msra.mxu0 0.0
    %286 = vmatprep.subr.mxu0 0.0
    %287 = vmatpush2.msra.mxu0 0.0
    %288 = vmatprep.subr.mxu0 0.0
    %289 = vmatpush2.msra.mxu0 0.0
    %290 = vmatprep.subr.mxu0 0.0
    %291 = vmatpush2.msra.mxu0 0.0
    %292 = vmatprep.subr.mxu0 0.0
    %293 = vmatpush2.msra.mxu0 0.0
    %294 = vmatprep.subr.mxu0 0.0
    %295 = vmatpush2.msra.mxu0 0.0
    %296 = vmatprep.subr.mxu0 0.0
    %297 = vmatpush2.msra.mxu0 0.0
    %298 = vmatprep.subr.mxu0 0.0
    %299 = vmatpush2.msra.mxu0 0.0
    %300 = vmatprep.subr.mxu0 0.0
    %301 = vmatpush2.msra.mxu0 0.0
    %302 = vmatprep.subr.mxu0 0.0
    %303 = vmatpush2.msra.mxu0 0.0
    %304 = vmatprep.subr.mxu0 0.0
    %305 = vmatpush2.msra.mxu0 0.0
    %306 = vmatprep.subr.mxu0 0.0
    %307 = vmatpush2.msra.mxu0 0.0
    %308 = vmatprep.subr.mxu0 0.0
    %309 = vmatpush2.msra.mxu0 0.0
    %310 = vmatprep.subr.mxu0 0.0
    %311 = vmatpush2.msra.mxu0 0.0
    %312 = vmatprep.subr.mxu0 0.0
    %313 = vmatpush2.msra.mxu0 0.0
    %314 = vmatprep.subr.mxu0 0.0
    %315 = vmatpush2.msra.mxu0 0.0
    %316 = vmatprep.mubr.f32.mxu0 0.0
    %317 = vmatmul.mubr.f32.gmra.mxu0 %v228
    %v318 = vpop.f32.mrf.mxu0
    %v319 = vadd.f32 %v251, %v318
    %v320 = vpop.f32.mrf.mxu0
    %321 = vmatprep.mubr.f32.mxu0 0.0
    %322 = vmatmul.mubr.f32.gmra.mxu0 %v229
    %v323 = vpop.f32.mrf.mxu0
    %v324 = vadd.f32 %v251, %v323
    %v325 = vpop.f32.mrf.mxu0
    %326 = vdwg.mxu0
    %v327 = vmax.f32 %v319, 0.0
    %v328 = vmax.f32 %v324, 0.0
    %s329 = scalar_lea.vmem [#allocation2], 256
    %v330 = vld [vmem:[%s329] sm:$0xff]
    %v331 = vld [vmem:[%s329 + $0x8] sm:$0xff]
    %v332 = vld [vmem:[%s329 + $0x10] sm:$0xff]
    %v333 = vld [vmem:[%s329 + $0x18] sm:$0xff]
    %v334 = vld [vmem:[%s329 + $0x20] sm:$0xff]
    %v335 = vld [vmem:[%s329 + $0x28] sm:$0xff]
    %v336 = vld [vmem:[%s329 + $0x30] sm:$0xff]
    %v337 = vld [vmem:[%s329 + $0x38] sm:$0xff]
    %v338 = vld [vmem:[%s329 + $0x40] sm:$0xff]
    %v339 = vld [vmem:[%s329 + $0x48] sm:$0xff]
    %v340 = vld [vmem:[%s329 + $0x50] sm:$0xff]
    %v341 = vld [vmem:[%s329 + $0x58] sm:$0xff]
    %v342 = vld [vmem:[%s329 + $0x60] sm:$0xff]
    %v343 = vld [vmem:[%s329 + $0x68] sm:$0xff]
    %v344 = vld [vmem:[%s329 + $0x70] sm:$0xff]
    %v345 = vld [vmem:[%s329 + $0x78] sm:$0xff]
    %v346 = vld [vmem:[%s4 + $0x3] sm:$0x1]
    %v347 = vlaneseq
    %v348 = vshrl.u32 %v347, 7
    %v349 = vsub.s32 0, %v348
    %v350 = vrot.slane %v346, %v349
    %351 = vmatprep.subr.mxu0 0.0
    %352 = vmatpush1.msra.mxu0 %v345
    %353 = vmatprep.subr.mxu0 0.0
    %354 = vmatpush1.msra.mxu0 %v344
    %355 = vmatprep.subr.mxu0 0.0
    %356 = vmatpush1.msra.mxu0 %v343
    %357 = vmatprep.subr.mxu0 0.0
    %358 = vmatpush1.msra.mxu0 %v342
    %359 = vmatprep.subr.mxu0 0.0
    %360 = vmatpush1.msra.mxu0 %v341
    %361 = vmatprep.subr.mxu0 0.0
    %362 = vmatpush1.msra.mxu0 %v340
    %363 = vmatprep.subr.mxu0 0.0
    %364 = vmatpush1.msra.mxu0 %v339
    %365 = vmatprep.subr.mxu0 0.0
    %366 = vmatpush1.msra.mxu0 %v338
    %367 = vmatprep.subr.mxu0 0.0
    %368 = vmatpush1.msra.mxu0 %v337
    %369 = vmatprep.subr.mxu0 0.0
    %370 = vmatpush1.msra.mxu0 %v336
    %371 = vmatprep.subr.mxu0 0.0
    %372 = vmatpush1.msra.mxu0 %v335
    %373 = vmatprep.subr.mxu0 0.0
    %374 = vmatpush1.msra.mxu0 %v334
    %375 = vmatprep.subr.mxu0 0.0
    %376 = vmatpush1.msra.mxu0 %v333
    %377 = vmatprep.subr.mxu0 0.0
    %378 = vmatpush1.msra.mxu0 %v332
    %379 = vmatprep.subr.mxu0 0.0
    %380 = vmatpush1.msra.mxu0 %v331
    %381 = vmatprep.subr.mxu0 0.0
    %382 = vmatpush1.msra.mxu0 %v330
    %383 = vmatprep.subr.mxu0 0.0
    %384 = vmatpush2.msra.mxu0 0.0
    %385 = vmatprep.subr.mxu0 0.0
    %386 = vmatpush2.msra.mxu0 0.0
    %387 = vmatprep.subr.mxu0 0.0
    %388 = vmatpush2.msra.mxu0 0.0
    %389 = vmatprep.subr.mxu0 0.0
    %390 = vmatpush2.msra.mxu0 0.0
    %391 = vmatprep.subr.mxu0 0.0
    %392 = vmatpush2.msra.mxu0 0.0
    %393 = vmatprep.subr.mxu0 0.0
    %394 = vmatpush2.msra.mxu0 0.0
    %395 = vmatprep.subr.mxu0 0.0
    %396 = vmatpush2.msra.mxu0 0.0
    %397 = vmatprep.subr.mxu0 0.0
    %398 = vmatpush2.msra.mxu0 0.0
    %399 = vmatprep.subr.mxu0 0.0
    %400 = vmatpush2.msra.mxu0 0.0
    %401 = vmatprep.subr.mxu0 0.0
    %402 = vmatpush2.msra.mxu0 0.0
    %403 = vmatprep.subr.mxu0 0.0
    %404 = vmatpush2.msra.mxu0 0.0
    %405 = vmatprep.subr.mxu0 0.0
    %406 = vmatpush2.msra.mxu0 0.0
    %407 = vmatprep.subr.mxu0 0.0
    %408 = vmatpush2.msra.mxu0 0.0
    %409 = vmatprep.subr.mxu0 0.0
    %410 = vmatpush2.msra.mxu0 0.0
    %411 = vmatprep.subr.mxu0 0.0
    %412 = vmatpush2.msra.mxu0 0.0
    %413 = vmatprep.subr.mxu0 0.0
    %414 = vmatpush2.msra.mxu0 0.0
    %415 = vmatprep.mubr.f32.mxu0 0.0
    %416 = vmatmul.mubr.f32.gmra.mxu0 %v327
    %v417 = vpop.f32.mrf.mxu0
    %v418 = vadd.f32 %v350, %v417
    %v419 = vpop.f32.mrf.mxu0
    %420 = vmatprep.mubr.f32.mxu0 0.0
    %421 = vmatmul.mubr.f32.gmra.mxu0 %v328
    %v422 = vpop.f32.mrf.mxu0
    %v423 = vadd.f32 %v350, %v422
    %v424 = vpop.f32.mrf.mxu0
    %425 = vdwg.mxu0
    %v426 = vmax.f32 %v418, 0.0
    %v427 = vmax.f32 %v423, 0.0
    %v428 = vld [vmem:[%s3] sm:$0xff]
    %v429 = vld [vmem:[%s3 + $0x8] sm:$0xff]
    %v430 = vld [vmem:[%s3 + $0x10] sm:$0xff]
    %v431 = vld [vmem:[%s3 + $0x18] sm:$0xff]
    %v432 = vld [vmem:[%s3 + $0x20] sm:$0xff]
    %v433 = vld [vmem:[%s3 + $0x28] sm:$0xff]
    %v434 = vld [vmem:[%s3 + $0x30] sm:$0xff]
    %v435 = vld [vmem:[%s3 + $0x38] sm:$0xff]
    %v436 = vld [vmem:[%s3 + $0x40] sm:$0xff]
    %v437 = vld [vmem:[%s3 + $0x48] sm:$0xff]
    %v438 = vld [vmem:[%s3 + $0x50] sm:$0xff]
    %v439 = vld [vmem:[%s3 + $0x58] sm:$0xff]
    %v440 = vld [vmem:[%s3 + $0x60] sm:$0xff]
    %v441 = vld [vmem:[%s3 + $0x68] sm:$0xff]
    %v442 = vld [vmem:[%s3 + $0x70] sm:$0xff]
    %v443 = vld [vmem:[%s3 + $0x78] sm:$0xff]
    %v444 = vld [vmem:[%s5] sm:$0x1]
    %v446 = vlaneseq
    %v447 = vshrl.u32 %v446, 7
    %v448 = vsub.s32 0, %v447
    %v449 = vrot.slane %v444, %v448
    %451 = vmatprep.subr.mxu0 0.0
    %452 = vmatpush1.msra.mxu0 %v443
    %453 = vmatprep.subr.mxu0 0.0
    %454 = vmatpush1.msra.mxu0 %v442
    %455 = vmatprep.subr.mxu0 0.0
    %456 = vmatpush1.msra.mxu0 %v441
    %457 = vmatprep.subr.mxu0 0.0
    %458 = vmatpush1.msra.mxu0 %v440
    %459 = vmatprep.subr.mxu0 0.0
    %460 = vmatpush1.msra.mxu0 %v439
    %461 = vmatprep.subr.mxu0 0.0
    %462 = vmatpush1.msra.mxu0 %v438
    %463 = vmatprep.subr.mxu0 0.0
    %464 = vmatpush1.msra.mxu0 %v437
    %465 = vmatprep.subr.mxu0 0.0
    %466 = vmatpush1.msra.mxu0 %v436
    %467 = vmatprep.subr.mxu0 0.0
    %468 = vmatpush1.msra.mxu0 %v435
    %469 = vmatprep.subr.mxu0 0.0
    %470 = vmatpush1.msra.mxu0 %v434
    %471 = vmatprep.subr.mxu0 0.0
    %472 = vmatpush1.msra.mxu0 %v433
    %473 = vmatprep.subr.mxu0 0.0
    %474 = vmatpush1.msra.mxu0 %v432
    %475 = vmatprep.subr.mxu0 0.0
    %476 = vmatpush1.msra.mxu0 %v431
    %477 = vmatprep.subr.mxu0 0.0
    %478 = vmatpush1.msra.mxu0 %v430
    %479 = vmatprep.subr.mxu0 0.0
    %480 = vmatpush1.msra.mxu0 %v429
    %481 = vmatprep.subr.mxu0 0.0
    %482 = vmatpush1.msra.mxu0 %v428
    %483 = vmatprep.subr.mxu0 0.0
    %484 = vmatpush2.msra.mxu0 0.0
    %485 = vmatprep.subr.mxu0 0.0
    %486 = vmatpush2.msra.mxu0 0.0
    %487 = vmatprep.subr.mxu0 0.0
    %488 = vmatpush2.msra.mxu0 0.0
    %489 = vmatprep.subr.mxu0 0.0
    %490 = vmatpush2.msra.mxu0 0.0
    %491 = vmatprep.subr.mxu0 0.0
    %492 = vmatpush2.msra.mxu0 0.0
    %493 = vmatprep.subr.mxu0 0.0
    %494 = vmatpush2.msra.mxu0 0.0
    %495 = vmatprep.subr.mxu0 0.0
    %496 = vmatpush2.msra.mxu0 0.0
    %497 = vmatprep.subr.mxu0 0.0
    %498 = vmatpush2.msra.mxu0 0.0
    %499 = vmatprep.subr.mxu0 0.0
    %500 = vmatpush2.msra.mxu0 0.0
    %501 = vmatprep.subr.mxu0 0.0
    %502 = vmatpush2.msra.mxu0 0.0
    %503 = vmatprep.subr.mxu0 0.0
    %504 = vmatpush2.msra.mxu0 0.0
    %505 = vmatprep.subr.mxu0 0.0
    %506 = vmatpush2.msra.mxu0 0.0
    %507 = vmatprep.subr.mxu0 0.0
    %508 = vmatpush2.msra.mxu0 0.0
    %509 = vmatprep.subr.mxu0 0.0
    %510 = vmatpush2.msra.mxu0 0.0
    %511 = vmatprep.subr.mxu0 0.0
    %512 = vmatpush2.msra.mxu0 0.0
    %513 = vmatprep.subr.mxu0 0.0
    %514 = vmatpush2.msra.mxu0 0.0
    %515 = vmatprep.mubr.f32.mxu0 0.0
    %516 = vmatmul.mubr.f32.gmra.mxu0 %v426
    %v517 = vpop.f32.mrf.mxu0
    %v518 = vadd.f32 %v449, %v517
    %v519 = vpop.f32.mrf.mxu0
    %520 = vmatprep.mubr.f32.mxu0 0.0
    %521 = vmatmul.mubr.f32.gmra.mxu0 %v427
    %v522 = vpop.f32.mrf.mxu0
    %v523 = vadd.f32 %v449, %v522
    %v524 = vpop.f32.mrf.mxu0
    %525 = vdwg.mxu0
    %vm526 = vcmask 64512
    %527 = vst.msk [vmem:[%s6] sm:$0xff] %vm526, %v518
    %528 = vst.msk [vmem:[%s6 + $0x8] sm:$0xff] %vm526, %v523
    // Predicated region
    $region30: #{mlp_forward.1} parent=1 // pred_check
      _
    $region31: #{mlp_forward.1} parent=1 // pred_check_branch
      %530 = sbr.rel (0) target = $region33
    $region32: #{mlp_forward.1} parent=1 // pred_region
      _
    $region33: #{mlp_forward.1} parent=1 // pred_fallthru
      _
    // Predicated region
    $region34: #{mlp_forward.1} parent=1 // pred_check
      _
    $region35: #{mlp_forward.1} parent=1 // pred_check_branch
      %532 = sbr.rel (0) target = $region37
    $region36: #{mlp_forward.1} parent=1 // pred_region
      _
    $region37: #{mlp_forward.1} parent=1 // pred_fallthru
      _
    %533 = vsyncpa [#allocation3], 1

</llo_original>
